<compile_context>
chip_gen: v7x
topology: tpu7x:2x2x1
jax: 0.10.0
libtpu: 0.0.40
codegen_flags: <defaults>
</compile_context>

<pallas_src>
import functools
import math

import jax
import jax.numpy as jnp
from jax.experimental import pallas as pl
from jax.experimental.pallas import tpu as pltpu

HIDDEN = 32             # hidden width of each sub-net
H2 = 2 * HIDDEN         # fused hidden width (64)
IN_DIM = 2              # (t, x)
IN_PAD = 8              # feature rows padded to a full sublane group
OUT_DIM = 2             # [h, u]
DEFAULT_TM = 2048       # batch tile (lanes per grid step), multiple of 128
MIN_TM = 128
TARGET_STEPS = 4        # aim for >= 4 grid steps (and an even count) for v7x


# ---------------------------------------------------------------------------
# Pallas kernel: fused 8 -> 64 -> 64 -> 2 MLP in batch-on-lanes layout.
#   x_ref : (IN_PAD, TM)  rows = [t, x, 1, 0, 0, 0, 0, 0]   (f32)
#   w1_ref: (H2, IN_PAD)  cols 0..1 = W1^T, col 2 = b1      (bf16 or f32)
#   w2_ref: (H2, H2), b2_ref: (H2, 1)
#   w3_ref: (OUT_DIM, H2), b3_ref: (OUT_DIM, 1)
#   o_ref : (OUT_DIM, TM)
# ---------------------------------------------------------------------------
def swenet_kernel(x_ref, w1_ref, w2_ref, b2_ref, w3_ref, b3_ref, o_ref):
    wdt = w1_ref.dtype
    x = x_ref[...]
    # TODO(synk): verify via pl.lower_as_mlir that jnp.tanh lowers to a single
    # EUP transcendental (not an exp-based VPU composite).
    z = jnp.tanh(jnp.dot(w1_ref[...], x.astype(wdt),
                         preferred_element_type=jnp.float32))            # (H2, TM)
    z = jnp.tanh(jnp.dot(w2_ref[...], z.astype(wdt),
                         preferred_element_type=jnp.float32) + b2_ref[...])  # (H2, TM)
    o_ref[...] = jnp.dot(w3_ref[...], z.astype(wdt),
                         preferred_element_type=jnp.float32) + b3_ref[...]   # (2, TM)


def _choose_grid(n):
    """Pick (tile, steps): large lane-aligned tile, >=TARGET_STEPS steps when
    possible, and an even step count so v7x's two TensorCores stay balanced."""
    tile = DEFAULT_TM
    while tile > MIN_TM and math.ceil(n / tile) < TARGET_STEPS:
        tile //= 2
    steps = max(1, math.ceil(n / tile))
    if steps > 1 and steps % 2 == 1:
        steps += 1
    return tile, steps


@functools.partial(jax.jit, static_argnames=("tile",))
def swenet_forward_slab(xs, w1, w2, b2, w3, b3, *, tile):
    """xs: (IN_PAD, n_pad) slab (rows [t, x, 1, 0...]); returns (2, n_pad) [h; u]."""
    n_pad = xs.shape[1]
    steps = n_pad // tile
    full = lambda shape: pl.BlockSpec(shape, lambda i: (0, 0))

    in_specs = [
        pl.BlockSpec((IN_PAD, tile), lambda i: (0, i)),   # streamed X tile
        full((H2, IN_PAD)),                               # W1 (+ folded b1)
        full((H2, H2)), full((H2, 1)),                    # W2, b2
        full((OUT_DIM, H2)), full((OUT_DIM, 1)),          # W3, b3
    ]
    out_spec = pl.BlockSpec((OUT_DIM, tile), lambda i: (0, i))

    return pl.pallas_call(
        swenet_kernel,
        out_shape=jax.ShapeDtypeStruct((OUT_DIM, n_pad), jnp.float32),
        grid_spec=pltpu.PrefetchScalarGridSpec(
            num_scalar_prefetch=0,
            grid=(steps,),
            in_specs=in_specs,
            out_specs=out_spec,
        ),
        compiler_params=pltpu.CompilerParams(
            dimension_semantics=("parallel",)),
    )(xs, w1, w2, b2, w3, b3)


def pack_inputs(x, n_pad):
    """(N, 2) -> (IN_PAD, n_pad) batch-on-lanes slab with a constant-ones row
    (bias fold) and zero feature/batch padding."""
    n = x.shape[0]
    xs = jnp.zeros((IN_PAD, n_pad), jnp.float32)
    xs = xs.at[:IN_DIM, :n].set(x.astype(jnp.float32).T)
    xs = xs.at[IN_DIM, :].set(1.0)
    return xs


def swenet_forward(x, packed_params, tile=None):
    """Convenience wrapper matching the PyTorch API.
    x: (N, 2) float32, any N.  Returns (N, 2) = cat(h(x), u(x), dim=1).
    (A PINN pipeline should prefer swenet_forward_slab to keep the
    batch-on-lanes layout end-to-end and skip these transposes.)"""
    n = x.shape[0]
    if tile is None:
        tile, steps = _choose_grid(n)
    else:
        steps = max(1, math.ceil(n / tile))
    xs = pack_inputs(x, steps * tile)
    out = swenet_forward_slab(xs, *packed_params, tile=tile)
    return out[:, :n].T


# ---------------------------------------------------------------------------
# Host-side parameter handling.
# ---------------------------------------------------------------------------
def init_params(key):
    """Deterministic synthetic parameters for the two sub-nets (_h, _u)."""
    keys = jax.random.split(key, 12)

    def lin(kw, kb, fan_in, fan_out):
        s = 1.0 / jnp.sqrt(jnp.float32(fan_in))
        w = jax.random.uniform(kw, (fan_in, fan_out), jnp.float32, -s, s)
        b = jax.random.uniform(kb, (1, fan_out), jnp.float32, -s, s)
        return w, b

    wh1, bh1 = lin(keys[0], keys[1], IN_DIM, HIDDEN)
    wh2, bh2 = lin(keys[2], keys[3], HIDDEN, HIDDEN)
    wh3, bh3 = lin(keys[4], keys[5], HIDDEN, 1)
    wu1, bu1 = lin(keys[6], keys[7], IN_DIM, HIDDEN)
    wu2, bu2 = lin(keys[8], keys[9], HIDDEN, HIDDEN)
    wu3, bu3 = lin(keys[10], keys[11], HIDDEN, 1)
    return (wh1, bh1, wh2, bh2, wh3, bh3, wu1, bu1, wu2, bu2, wu3, bu3)


def pack_params(params, weight_dtype=jnp.bfloat16):
    """Fuse _h/_u into one MLP, transpose for batch-on-lanes, fold b1 into W1,
    and cast the matmul weights to `weight_dtype` (bf16 by default)."""
    (wh1, bh1, wh2, bh2, wh3, bh3,
     wu1, bu1, wu2, bu2, wu3, bu3) = params

    w1 = jnp.concatenate([wh1, wu1], axis=1)                    # (2, 2H)
    b1 = jnp.concatenate([bh1, bu1], axis=1)                    # (1, 2H)
    w1f = jnp.zeros((H2, IN_PAD), jnp.float32)
    w1f = w1f.at[:, :IN_DIM].set(w1.T)
    w1f = w1f.at[:, IN_DIM:IN_DIM + 1].set(b1.T)                # b1 folded (ones row)

    w2 = jnp.zeros((H2, H2), jnp.float32)
    w2 = w2.at[:HIDDEN, :HIDDEN].set(wh2).at[HIDDEN:, HIDDEN:].set(wu2)  # blockdiag
    b2 = jnp.concatenate([bh2, bu2], axis=1)                    # (1, 2H)

    w3 = jnp.zeros((H2, OUT_DIM), jnp.float32)
    w3 = w3.at[:HIDDEN, 0:1].set(wh3).at[HIDDEN:, 1:2].set(wu3)  # [h, u] columns
    b3 = jnp.concatenate([bh3, bu3], axis=1)                    # (1, 2)

    return (w1f.astype(weight_dtype),
            w2.T.astype(weight_dtype), b2.T.astype(jnp.float32),
            w3.T.astype(weight_dtype), b3.T.astype(jnp.float32))


def reference_forward(x, params):
    """Pure-JAX reference matching the PyTorch forward (unfused)."""
    (wh1, bh1, wh2, bh2, wh3, bh3,
     wu1, bu1, wu2, bu2, wu3, bu3) = params

    def mlp(x, w1, b1, w2, b2, w3, b3):
        z = jnp.tanh(x @ w1 + b1)
        z = jnp.tanh(z @ w2 + b2)
        return z @ w3 + b3

    h = mlp(x, wh1, bh1, wh2, bh2, wh3, bh3)
    u = mlp(x, wu1, bu1, wu2, bu2, wu3, bu3)
    return jnp.concatenate([h, u], axis=1)


if __name__ == "__main__":
    key = jax.random.PRNGKey(0)
    k_params, k_x = jax.random.split(key)
    params = init_params(k_params)

    n = 1000                                               # ragged batch (exercises padding)
    x = jax.random.uniform(k_x, (n, IN_DIM), jnp.float32, -1.0, 1.0)   # (t, x) pairs
    ref = reference_forward(x, params)

    # Default path: bf16 matmul weights (f32 accumulation / activations).
    packed_bf16 = pack_params(params, weight_dtype=jnp.bfloat16)
    out = jax.block_until_ready(swenet_forward(x, packed_bf16))
    assert out.shape == (n, OUT_DIM)
    err_bf16 = float(jnp.max(jnp.abs(out - ref)))
    assert err_bf16 < 3e-2, err_bf16

    # Structural-exactness check: same kernel with f32 weights.
    packed_f32 = pack_params(params, weight_dtype=jnp.float32)
    out32 = jax.block_until_ready(swenet_forward(x, packed_f32))
    err_f32 = float(jnp.max(jnp.abs(out32 - ref)))
    assert err_f32 < 2e-4, err_f32

    # TODO(synk): interior_loss / q / f / flux PDE residuals use jacrev over
    # inputs plus the _flux_hu2p net and IC/BC losses; those are autodiff /
    # elementwise constructs handled by JAX outside this kernel.
    print("KERNEL_OK")
</pallas_src>

<mosaic_0001>
module attributes {stable_mosaic.version = 11 : i64} {
  func.func @swenet_kernel(%arg0: i32, %arg1: memref<8x256xf32, #tpu.memory_space<vmem>>, %arg2: memref<64x8xbf16, #tpu.memory_space<vmem>>, %arg3: memref<64x64xbf16, #tpu.memory_space<vmem>>, %arg4: memref<64x1xf32, #tpu.memory_space<vmem>>, %arg5: memref<2x64xbf16, #tpu.memory_space<vmem>>, %arg6: memref<2x1xf32, #tpu.memory_space<vmem>>, %arg7: memref<2x256xf32, #tpu.memory_space<vmem>>) attributes {dimension_semantics = [#tpu.dimension_semantics<parallel>], iteration_bounds = array<i64: 4>, scalar_prefetch = 0 : i64, scratch_operands = 0 : i64, tpu.core_type = #tpu.core_type<tc>, window_params = [{transform_indices = @transform_0, window_bounds = array<i64: 8, 256>}, {pipeline_mode = #tpu.pipeline_mode<synchronous>, transform_indices = @transform_1, window_bounds = array<i64: 64, 8>}, {pipeline_mode = #tpu.pipeline_mode<synchronous>, transform_indices = @transform_2, window_bounds = array<i64: 64, 64>}, {pipeline_mode = #tpu.pipeline_mode<synchronous>, transform_indices = @transform_3, window_bounds = array<i64: 64, 1>}, {pipeline_mode = #tpu.pipeline_mode<synchronous>, transform_indices = @transform_4, window_bounds = array<i64: 2, 64>}, {pipeline_mode = #tpu.pipeline_mode<synchronous>, transform_indices = @transform_5, window_bounds = array<i64: 2, 1>}, {transform_indices = @transform_6, window_bounds = array<i64: 2, 256>}]} {
    %c0 = arith.constant 0 : index
    %c0_0 = arith.constant 0 : index
    %0 = vector.load %arg1[%c0, %c0_0] : memref<8x256xf32, #tpu.memory_space<vmem>>, vector<8x256xf32>
    %c0_1 = arith.constant 0 : index
    %c0_2 = arith.constant 0 : index
    %1 = vector.load %arg2[%c0_1, %c0_2] : memref<64x8xbf16, #tpu.memory_space<vmem>>, vector<64x8xbf16>
    %2 = arith.truncf %0 : vector<8x256xf32> to vector<8x256xbf16>
    %cst = arith.constant dense<0.000000e+00> : vector<64x256xf32>
    %3 = tpu.matmul %1, %2, %cst {dimension_numbers = #tpu.dot_dimension_numbers<[1], [0], [0], [1], [0, 0, 1, 1], [], []>} : vector<64x8xbf16>, vector<8x256xbf16>, vector<64x256xf32> -> vector<64x256xf32>
    %4 = math.tanh %3 : vector<64x256xf32>
    %c0_3 = arith.constant 0 : index
    %c0_4 = arith.constant 0 : index
    %5 = vector.load %arg3[%c0_3, %c0_4] : memref<64x64xbf16, #tpu.memory_space<vmem>>, vector<64x64xbf16>
    %6 = arith.truncf %4 : vector<64x256xf32> to vector<64x256xbf16>
    %cst_5 = arith.constant dense<0.000000e+00> : vector<64x256xf32>
    %7 = tpu.matmul %5, %6, %cst_5 {dimension_numbers = #tpu.dot_dimension_numbers<[1], [0], [0], [1], [0, 0, 1, 1], [], []>} : vector<64x64xbf16>, vector<64x256xbf16>, vector<64x256xf32> -> vector<64x256xf32>
    %c0_6 = arith.constant 0 : index
    %c0_7 = arith.constant 0 : index
    %8 = vector.load %arg4[%c0_6, %c0_7] : memref<64x1xf32, #tpu.memory_space<vmem>>, vector<64x1xf32>
    %9 = vector.broadcast %8 : vector<64x1xf32> to vector<64x256xf32>
    %10 = arith.addf %7, %9 : vector<64x256xf32>
    %11 = math.tanh %10 : vector<64x256xf32>
    %c0_8 = arith.constant 0 : index
    %c0_9 = arith.constant 0 : index
    %12 = vector.load %arg5[%c0_8, %c0_9] : memref<2x64xbf16, #tpu.memory_space<vmem>>, vector<2x64xbf16>
    %13 = arith.truncf %11 : vector<64x256xf32> to vector<64x256xbf16>
    %cst_10 = arith.constant dense<0.000000e+00> : vector<2x256xf32>
    %14 = tpu.matmul %12, %13, %cst_10 {dimension_numbers = #tpu.dot_dimension_numbers<[1], [0], [0], [1], [0, 0, 1, 1], [], []>} : vector<2x64xbf16>, vector<64x256xbf16>, vector<2x256xf32> -> vector<2x256xf32>
    %c0_11 = arith.constant 0 : index
    %c0_12 = arith.constant 0 : index
    %15 = vector.load %arg6[%c0_11, %c0_12] : memref<2x1xf32, #tpu.memory_space<vmem>>, vector<2x1xf32>
    %16 = vector.broadcast %15 : vector<2x1xf32> to vector<2x256xf32>
    %17 = arith.addf %14, %16 : vector<2x256xf32>
    %c0_13 = arith.constant 0 : index
    %c0_14 = arith.constant 0 : index
    %18 = vector.load %arg7[%c0_13, %c0_14] : memref<2x256xf32, #tpu.memory_space<vmem>>, vector<2x256xf32>
    tpu.vector_store %arg7[%c0_13, %c0_14], %17 {strides = array<i32>} : memref<2x256xf32, #tpu.memory_space<vmem>>, vector<2x256xf32>,
    return
  }
  func.func @transform_0(%arg0: i32) -> (i32, i32) {
    %c0_i32 = arith.constant 0 : i32
    %c0_i32_0 = arith.constant 0 : i32
    return %c0_i32, %arg0 : i32, i32
  }
  func.func @transform_1(%arg0: i32) -> (i32, i32) {
    %c0_i32 = arith.constant 0 : i32
    %c0_i32_0 = arith.constant 0 : i32
    %c0_i32_1 = arith.constant 0 : i32
    return %c0_i32, %c0_i32_0 : i32, i32
  }
  func.func @transform_2(%arg0: i32) -> (i32, i32) {
    %c0_i32 = arith.constant 0 : i32
    %c0_i32_0 = arith.constant 0 : i32
    %c0_i32_1 = arith.constant 0 : i32
    return %c0_i32, %c0_i32_0 : i32, i32
  }
  func.func @transform_3(%arg0: i32) -> (i32, i32) {
    %c0_i32 = arith.constant 0 : i32
    %c0_i32_0 = arith.constant 0 : i32
    %c0_i32_1 = arith.constant 0 : i32
    return %c0_i32, %c0_i32_0 : i32, i32
  }
  func.func @transform_4(%arg0: i32) -> (i32, i32) {
    %c0_i32 = arith.constant 0 : i32
    %c0_i32_0 = arith.constant 0 : i32
    %c0_i32_1 = arith.constant 0 : i32
    return %c0_i32, %c0_i32_0 : i32, i32
  }
  func.func @transform_5(%arg0: i32) -> (i32, i32) {
    %c0_i32 = arith.constant 0 : i32
    %c0_i32_0 = arith.constant 0 : i32
    %c0_i32_1 = arith.constant 0 : i32
    return %c0_i32, %c0_i32_0 : i32, i32
  }
  func.func @transform_6(%arg0: i32) -> (i32, i32) {
    %c0_i32 = arith.constant 0 : i32
    %c0_i32_0 = arith.constant 0 : i32
    return %c0_i32, %arg0 : i32, i32
  }
}

</mosaic_0001>

<llo_original>
// kernel: swenet_forward_slab.1
$region0: #{swenet_forward_slab.1}
  #allocation0 [shape = 'u32[]', space=smem, size = 0x4, offset = 0x4, fixed_abs, tag = 'smem constant byte address 0x4 - core index']
  #allocation1 [shape = 'u32[144,128]{1,0:T(1,128)}', space=vmem, size = 0x12000, scoped, tag = 'internal scratch']
  %s0 = inlined_call_operand.vmem [shape: f32[8,1024], index: 0, kind: input, shape index: {}]
  %s1 = inlined_call_operand.vmem [shape: bf16[64,8], index: 1, kind: input, shape index: {}]
  %s2 = inlined_call_operand.vmem [shape: bf16[64,64], index: 2, kind: input, shape index: {}]
  %s3 = inlined_call_operand.vmem [shape: f32[64,1], index: 3, kind: input, shape index: {}]
  %s4 = inlined_call_operand.vmem [shape: bf16[2,64], index: 4, kind: input, shape index: {}]
  %s5 = inlined_call_operand.vmem [shape: f32[2,1], index: 5, kind: input, shape index: {}]
  %s6 = inlined_call_operand.hbm [shape: f32[2,1024], index: 6, kind: output, shape index: {}]
  %s7 = sld [smem:[#allocation0]]
  $region57: #{swenet_forward_slab.1} parent=0
    _
  %s9 = ssub.s32 1, %s7
  %s10 = scalar_select 0, %s9, %s7
  $region1: #{swenet_forward_slab.1} parent=0
    #allocation2 [shape = 'u8[4096]{0}', space=vmem, size = 0x1000, scoped, tag = 'output window, operand 0']
    #allocation3 [shape = 's32[2]{0}', space=sflag, size = 0x8, scoped, tag = 'scoped memory for swenet_forward_slab.1']
    %11 = vsyncpa [#allocation3], 0
    %s12 = scalar_lea.sflag [#allocation3], 1
    %13 = vsyncpa %s12, 0
    loop: start=0, step=1, limit=6
    $region2: #{swenet_forward_slab.1} parent=1 // loop_pre_header
      _
    $region3: #{swenet_forward_slab.1} parent=1 // loop_header
      %s15 = sphi 0, %s19
      %p16 = scmp.ge.s32.totalorder %s15, 6
      %s25 = sphi 0, %s27
      %s28 = sphi 0, %s25
      %s29 = sphi 0, %s28
      %s45 = sphi 0, %s29
      %s49 = sphi 0, %s49
      %s51 = sphi 0, %s49
      %s52 = sphi 0, %s51
      %s66 = sphi 0, %s52
      %s70 = sphi 0, %s70
      %s72 = sphi 0, %s70
      %s73 = sphi 0, %s72
      %s87 = sphi 0, %s73
      %s91 = sphi 0, %s91
      %s93 = sphi 0, %s91
      %s94 = sphi 0, %s93
      %s108 = sphi 0, %s94
      %s112 = sphi 0, %s112
      %s114 = sphi 0, %s112
      %s115 = sphi 0, %s114
      %s129 = sphi 0, %s115
      %s133 = sphi 0, %s133
      %s135 = sphi 0, %s133
      %s136 = sphi 0, %s135
      %s150 = sphi 0, %s136
      %s156 = sphi 0, %s158
      %s159 = sphi 0, %s156
      %s160 = sphi 0, %s159
      %s176 = sphi 0, %s160
    $region4: #{swenet_forward_slab.1} parent=1 // loop_header_branch
      %18 = sbr.rel (%p16) target = $region8
    $region5: #{swenet_forward_slab.1} parent=1 // loop_body
      %s20 = ssub.s32 %s15, 1
      %s21 = ssub.s32 %s15, 2
      %s22 = sadd.s32 %s15, 1
      %s23 = ssub.s32 %s15, %s22
      %p24 = scmp.eq.s32.totalorder %s23, 0
      %s26 = sadd.s32 %s25, 1
      %s27 = scalar_select %p24, %s25, %s26
      %p30 = pneg %p24
      %p31 = scmp.eq.s32.totalorder %s15, 3
      %p32 = por %p30, %p31
      %p33 = scmp.ne.s32.totalorder %s25, %s28
      %p34 = scmp.eq.s32.totalorder %s15, 0
      %p35 = por %p33, %p34
      %p36 = scmp.ne.s32.totalorder %s25, %s28
      %p37 = scmp.eq.s32.totalorder %s20, 3
      %p38 = por %p36, %p37
      %p39 = scmp.ne.s32.totalorder %s28, %s29
      %p40 = scmp.eq.s32.totalorder %s20, 0
      %p41 = por %p39, %p40
      %p42 = scmp.ne.s32.totalorder %s28, %s29
      %p43 = scmp.eq.s32.totalorder %s21, 3
      %p44 = por %p42, %p43
      %p46 = scmp.ne.s32.totalorder %s29, %s45
      %p47 = scmp.eq.s32.totalorder %s21, 0
      %p48 = por %p46, %p47
      %s50 = sadd.s32 %s49, 1
      %p53 = scmp.eq.s32.totalorder %s15, 3
      %p54 = scmp.ne.s32.totalorder %s49, %s51
      %p55 = scmp.eq.s32.totalorder %s15, 0
      %p56 = por %p54, %p55
      %p57 = scmp.ne.s32.totalorder %s49, %s51
      %p58 = scmp.eq.s32.totalorder %s20, 3
      %p59 = por %p57, %p58
      %p60 = scmp.ne.s32.totalorder %s51, %s52
      %p61 = scmp.eq.s32.totalorder %s20, 0
      %p62 = por %p60, %p61
      %p63 = scmp.ne.s32.totalorder %s51, %s52
      %p64 = scmp.eq.s32.totalorder %s21, 3
      %p65 = por %p63, %p64
      %p67 = scmp.ne.s32.totalorder %s52, %s66
      %p68 = scmp.eq.s32.totalorder %s21, 0
      %p69 = por %p67, %p68
      %s71 = sadd.s32 %s70, 1
      %p74 = scmp.eq.s32.totalorder %s15, 3
      %p75 = scmp.ne.s32.totalorder %s70, %s72
      %p76 = scmp.eq.s32.totalorder %s15, 0
      %p77 = por %p75, %p76
      %p78 = scmp.ne.s32.totalorder %s70, %s72
      %p79 = scmp.eq.s32.totalorder %s20, 3
      %p80 = por %p78, %p79
      %p81 = scmp.ne.s32.totalorder %s72, %s73
      %p82 = scmp.eq.s32.totalorder %s20, 0
      %p83 = por %p81, %p82
      %p84 = scmp.ne.s32.totalorder %s72, %s73
      %p85 = scmp.eq.s32.totalorder %s21, 3
      %p86 = por %p84, %p85
      %p88 = scmp.ne.s32.totalorder %s73, %s87
      %p89 = scmp.eq.s32.totalorder %s21, 0
      %p90 = por %p88, %p89
      %s92 = sadd.s32 %s91, 1
      %p95 = scmp.eq.s32.totalorder %s15, 3
      %p96 = scmp.ne.s32.totalorder %s91, %s93
      %p97 = scmp.eq.s32.totalorder %s15, 0
      %p98 = por %p96, %p97
      %p99 = scmp.ne.s32.totalorder %s91, %s93
      %p100 = scmp.eq.s32.totalorder %s20, 3
      %p101 = por %p99, %p100
      %p102 = scmp.ne.s32.totalorder %s93, %s94
      %p103 = scmp.eq.s32.totalorder %s20, 0
      %p104 = por %p102, %p103
      %p105 = scmp.ne.s32.totalorder %s93, %s94
      %p106 = scmp.eq.s32.totalorder %s21, 3
      %p107 = por %p105, %p106
      %p109 = scmp.ne.s32.totalorder %s94, %s108
      %p110 = scmp.eq.s32.totalorder %s21, 0
      %p111 = por %p109, %p110
      %s113 = sadd.s32 %s112, 1
      %p116 = scmp.eq.s32.totalorder %s15, 3
      %p117 = scmp.ne.s32.totalorder %s112, %s114
      %p118 = scmp.eq.s32.totalorder %s15, 0
      %p119 = por %p117, %p118
      %p120 = scmp.ne.s32.totalorder %s112, %s114
      %p121 = scmp.eq.s32.totalorder %s20, 3
      %p122 = por %p120, %p121
      %p123 = scmp.ne.s32.totalorder %s114, %s115
      %p124 = scmp.eq.s32.totalorder %s20, 0
      %p125 = por %p123, %p124
      %p126 = scmp.ne.s32.totalorder %s114, %s115
      %p127 = scmp.eq.s32.totalorder %s21, 3
      %p128 = por %p126, %p127
      %p130 = scmp.ne.s32.totalorder %s115, %s129
      %p131 = scmp.eq.s32.totalorder %s21, 0
      %p132 = por %p130, %p131
      %s134 = sadd.s32 %s133, 1
      %p137 = scmp.eq.s32.totalorder %s15, 3
      %p138 = scmp.ne.s32.totalorder %s133, %s135
      %p139 = scmp.eq.s32.totalorder %s15, 0
      %p140 = por %p138, %p139
      %p141 = scmp.ne.s32.totalorder %s133, %s135
      %p142 = scmp.eq.s32.totalorder %s20, 3
      %p143 = por %p141, %p142
      %p144 = scmp.ne.s32.totalorder %s135, %s136
      %p145 = scmp.eq.s32.totalorder %s20, 0
      %p146 = por %p144, %p145
      %p147 = scmp.ne.s32.totalorder %s135, %s136
      %p148 = scmp.eq.s32.totalorder %s21, 3
      %p149 = por %p147, %p148
      %p151 = scmp.ne.s32.totalorder %s136, %s150
      %p152 = scmp.eq.s32.totalorder %s21, 0
      %p153 = por %p151, %p152
      %s154 = ssub.s32 %s15, %s22
      %p155 = scmp.eq.s32.totalorder %s154, 0
      %s157 = sadd.s32 %s156, 1
      %s158 = scalar_select %p155, %s156, %s157
      %p161 = pneg %p155
      %p162 = scmp.eq.s32.totalorder %s15, 3
      %p163 = por %p161, %p162
      %p164 = scmp.ne.s32.totalorder %s156, %s159
      %p165 = scmp.eq.s32.totalorder %s15, 0
      %p166 = por %p164, %p165
      %p167 = scmp.ne.s32.totalorder %s156, %s159
      %p168 = scmp.eq.s32.totalorder %s20, 3
      %p169 = por %p167, %p168
      %p170 = scmp.ne.s32.totalorder %s159, %s160
      %p171 = scmp.eq.s32.totalorder %s20, 0
      %p172 = por %p170, %p171
      %p173 = scmp.ne.s32.totalorder %s159, %s160
      %p174 = scmp.eq.s32.totalorder %s21, 3
      %p175 = por %p173, %p174
      %p177 = scmp.ne.s32.totalorder %s160, %s176
      %p178 = scmp.eq.s32.totalorder %s21, 0
      %p179 = por %p177, %p178
      %p180 = scmp.le.s32.totalorder 1, %s15
      %p181 = scmp.lt.s32.totalorder %s15, 5
      %p182 = pnand %p180, %p181
      %p183 = pneg %p182
      // Predicated region
      $region9: #{swenet_forward_slab.1} parent=5 // pred_check
        _
      $region10: #{swenet_forward_slab.1} parent=5 // pred_check_branch
        %185 = sbr.rel (%p182) target = $region12
      $region11: #{swenet_forward_slab.1} parent=5 // pred_region
        %s186 = ssub.s32 %s15, 1
        // Predicated region
        $region13: #{swenet_forward_slab.1} parent=11 // pred_check
          %p187 = pneg %p62
        $region14: #{swenet_forward_slab.1} parent=11 // pred_check_branch
          %189 = sbr.rel (%p187) target = $region16
        $region15: #{swenet_forward_slab.1} parent=11 // pred_region
          _
        $region16: #{swenet_forward_slab.1} parent=11 // pred_fallthru
          _
        // Predicated region
        $region17: #{swenet_forward_slab.1} parent=11 // pred_check
          %p190 = pneg %p83
        $region18: #{swenet_forward_slab.1} parent=11 // pred_check_branch
          %192 = sbr.rel (%p190) target = $region20
        $region19: #{swenet_forward_slab.1} parent=11 // pred_region
          _
        $region20: #{swenet_forward_slab.1} parent=11 // pred_fallthru
          _
        // Predicated region
        $region21: #{swenet_forward_slab.1} parent=11 // pred_check
          %p193 = pneg %p104
        $region22: #{swenet_forward_slab.1} parent=11 // pred_check_branch
          %195 = sbr.rel (%p193) target = $region24
        $region23: #{swenet_forward_slab.1} parent=11 // pred_region
          _
        $region24: #{swenet_forward_slab.1} parent=11 // pred_fallthru
          _
        // Predicated region
        $region25: #{swenet_forward_slab.1} parent=11 // pred_check
          %p196 = pneg %p125
        $region26: #{swenet_forward_slab.1} parent=11 // pred_check_branch
          %198 = sbr.rel (%p196) target = $region28
        $region27: #{swenet_forward_slab.1} parent=11 // pred_region
          _
        $region28: #{swenet_forward_slab.1} parent=11 // pred_fallthru
          _
        // Predicated region
        $region29: #{swenet_forward_slab.1} parent=11 // pred_check
          %p199 = pneg %p146
        $region30: #{swenet_forward_slab.1} parent=11 // pred_check_branch
          %201 = sbr.rel (%p199) target = $region32
        $region31: #{swenet_forward_slab.1} parent=11 // pred_region
          _
        $region32: #{swenet_forward_slab.1} parent=11 // pred_fallthru
          _
      $region12: #{swenet_forward_slab.1} parent=5 // pred_fallthru
        _
      %p202 = scmp.lt.s32.totalorder %s15, 4
      // Predicated region
      $region33: #{swenet_forward_slab.1} parent=5 // pred_check
        %p203 = pneg %p202
      $region34: #{swenet_forward_slab.1} parent=5 // pred_check_branch
        %205 = sbr.rel (%p203) target = $region36
      $region35: #{swenet_forward_slab.1} parent=5 // pred_region
        // Predicated region
        $region37: #{swenet_forward_slab.1} parent=35 // pred_check
          %p206 = pneg %p35
        $region38: #{swenet_forward_slab.1} parent=35 // pred_check_branch
          %208 = sbr.rel (%p206) target = $region40
        $region39: #{swenet_forward_slab.1} parent=35 // pred_region
          %s209 = smul.u32 2, %s15
          %p210 = scmp.lt.s32.totalorder %s209, 7
          %s211 = scalar_select %p210, %s209, 7
          %s212 = smul.addr %s211, 8
          %s213 = scalar_lea.vmem %s0, %s212
          %s214 = smul.u32 2, %s15
        $region40: #{swenet_forward_slab.1} parent=35 // pred_fallthru
          _
      $region36: #{swenet_forward_slab.1} parent=5 // pred_fallthru
        _
      %p215 = scmp.le.s32.totalorder 1, %s15
      %p216 = scmp.lt.s32.totalorder %s15, 5
      %p217 = pnand %p215, %p216
      %p218 = pneg %p217
      // Predicated region
      $region41: #{swenet_forward_slab.1} parent=5 // pred_check
        _
      $region42: #{swenet_forward_slab.1} parent=5 // pred_check_branch
        %220 = sbr.rel (%p217) target = $region44
      $region43: #{swenet_forward_slab.1} parent=5 // pred_region
        %s221 = ssub.s32 %s15, 1
        %s222 = smul.u32 2, %s20
        %p223 = scmp.lt.s32.totalorder %s222, 7
        %s224 = scalar_select %p223, %s222, 7
        %s225 = smul.addr %s224, 8
        %s226 = scalar_lea.vmem %s0, %s225
        %p227 = pneg %p41
        %p228 = pneg %p38
        %p229 = pneg %p62
        %p230 = pneg %p59
        %p231 = pneg %p83
        %p232 = pneg %p80
        %p233 = pneg %p104
        %p234 = pneg %p101
        %p235 = pneg %p125
        %p236 = pneg %p122
        %p237 = pneg %p146
        %p238 = pneg %p143
        %p239 = pneg %p172
        %p240 = pneg %p169
        %s241 = sand.u32 %s159, 1
        %s242 = scalar_lea.sflag [#allocation3], %s241
        %s243 = sand.u32 %s159, 1
        %s244 = smul.addr %s243, 4
        %s245 = scalar_lea.vmem [#allocation2], %s244
        %s246 = smul.u32 2, %s20
        %p247 = scmp.lt.s32.totalorder %s246, 7
        %s248 = scalar_select %p247, %s246, 7
        %s249 = smul.addr %s248, 8
        %s250 = scalar_lea.vmem %s0, %s249
        %s251 = smul.u32 2, %s20
        %s252 = smul.u32 2, %s20
        %v254 = vld [vmem:[%s250] sm:$0xff]
        %v255 = vld [vmem:[%s250 + $0x8] sm:$0xff]
        %v256 = vld [vmem:[%s1] sm:$0xf]
        %v257 = vld [vmem:[%s1 + $0x4] sm:$0xf]
        %v258 = vld [vmem:[%s1 + $0x8] sm:$0xf]
        %v259 = vld [vmem:[%s1 + $0xc] sm:$0xf]
        %v260 = vld [vmem:[%s1 + $0x10] sm:$0xf]
        %v261 = vld [vmem:[%s1 + $0x14] sm:$0xf]
        %v262 = vld [vmem:[%s1 + $0x18] sm:$0xf]
        %v263 = vld [vmem:[%s1 + $0x1c] sm:$0xf]
        %v264 = vpack.c.bf16 %v254, %v254
        %v265 = vpack.c.bf16 %v255, %v255
        %v274 = vunpack.c.l.b16 %v256
        %v275 = vunpack.c.l.b16 %v257
        %v276 = vunpack.c.l.b16 %v258
        %v277 = vunpack.c.l.b16 %v259
        %v278 = vunpack.c.l.b16 %v260
        %v279 = vunpack.c.l.b16 %v261
        %v280 = vunpack.c.l.b16 %v262
        %v281 = vunpack.c.l.b16 %v263
        %v282 = vpack.c.b16 %v275, %v274
        %v283 = vpack.c.b16 %v277, %v276
        %v284 = vpack.c.b16 %v279, %v278
        %v285 = vpack.c.b16 %v281, %v280
        %vm286 = vcmask 64512
        %v288 = vsel %vm286, %v282, 0
        %v291 = vsel %vm286, %v283, 0
        %v294 = vsel %vm286, %v284, 0
        %v297 = vsel %vm286, %v285, 0
        %vm299 = vcmask 1043456
        %v301 = vsel %vm299, %v264, 0
        %v304 = vsel %vm299, %v265, 0
        %306 = vmatprep.subr.bf16.mxu0 %v304
        %307 = vmatpush1.bf16.msra.mxu0 %v301
        %308 = vmatprep.subr.bf16.mxu0 0
        %309 = vmatpush1.bf16.msra.mxu0 0
        %310 = vmatprep.subr.bf16.mxu0 0
        %311 = vmatpush1.bf16.msra.mxu0 0
        %312 = vmatprep.subr.bf16.mxu0 0
        %313 = vmatpush1.bf16.msra.mxu0 0
        %314 = vmatprep.subr.bf16.mxu0 0
        %315 = vmatpush1.bf16.msra.mxu0 0
        %316 = vmatprep.subr.bf16.mxu0 0
        %317 = vmatpush1.bf16.msra.mxu0 0
        %318 = vmatprep.subr.bf16.mxu0 0
        %319 = vmatpush1.bf16.msra.mxu0 0
        %320 = vmatprep.subr.bf16.mxu0 0
        %321 = vmatpush1.bf16.msra.mxu0 0
        %322 = vmatprep.subr.bf16.mxu0 0
        %323 = vmatpush1.bf16.msra.mxu0 0
        %324 = vmatprep.subr.bf16.mxu0 0
        %325 = vmatpush1.bf16.msra.mxu0 0
        %326 = vmatprep.subr.bf16.mxu0 0
        %327 = vmatpush1.bf16.msra.mxu0 0
        %328 = vmatprep.subr.bf16.mxu0 0
        %329 = vmatpush1.bf16.msra.mxu0 0
        %330 = vmatprep.subr.bf16.mxu0 0
        %331 = vmatpush1.bf16.msra.mxu0 0
        %332 = vmatprep.subr.bf16.mxu0 0
        %333 = vmatpush1.bf16.msra.mxu0 0
        %334 = vmatprep.subr.bf16.mxu0 0
        %335 = vmatpush1.bf16.msra.mxu0 0
        %336 = vmatprep.subr.bf16.mxu0 0
        %337 = vmatpush1.bf16.msra.mxu0 0
        %338 = vmatprep.mubr.bf16.mxu0 0
        %339 = vmatmul.mubr.bf16.gmra.mrb[0].mxu0 %v288
        %v340 = vpop.f32.mrb[0].mxu0
        %v341 = vadd.f32 0.0, %v340
        %v342 = vpop.f32.mrb[0].mxu0
        %v343 = vadd.f32 0.0, %v342
        %v344 = vpop.f32.mrb[0].mxu0
        %v345 = vadd.f32 0.0, %v344
        %v346 = vpop.f32.mrb[0].mxu0
        %v347 = vadd.f32 0.0, %v346
        %348 = vmatprep.mubr.bf16.mxu0 0
        %349 = vmatmul.mubr.bf16.gmra.mrb[0].mxu0 %v291
        %v350 = vpop.f32.mrb[0].mxu0
        %v351 = vadd.f32 0.0, %v350
        %v352 = vpop.f32.mrb[0].mxu0
        %v353 = vadd.f32 0.0, %v352
        %v354 = vpop.f32.mrb[0].mxu0
        %v355 = vadd.f32 0.0, %v354
        %v356 = vpop.f32.mrb[0].mxu0
        %v357 = vadd.f32 0.0, %v356
        %358 = vmatprep.mubr.bf16.mxu0 0
        %359 = vmatmul.mubr.bf16.gmra.mrb[0].mxu0 %v294
        %v360 = vpop.f32.mrb[0].mxu0
        %v361 = vadd.f32 0.0, %v360
        %v362 = vpop.f32.mrb[0].mxu0
        %v363 = vadd.f32 0.0, %v362
        %v364 = vpop.f32.mrb[0].mxu0
        %v365 = vadd.f32 0.0, %v364
        %v366 = vpop.f32.mrb[0].mxu0
        %v367 = vadd.f32 0.0, %v366
        %368 = vmatprep.mubr.bf16.mxu0 0
        %369 = vmatmul.mubr.bf16.gmra.mrb[0].mxu0 %v297
        %v370 = vpop.f32.mrb[0].mxu0
        %v371 = vadd.f32 0.0, %v370
        %v372 = vpop.f32.mrb[0].mxu0
        %v373 = vadd.f32 0.0, %v372
        %v374 = vpop.f32.mrb[0].mxu0
        %v375 = vadd.f32 0.0, %v374
        %v376 = vpop.f32.mrb[0].mxu0
        %v377 = vadd.f32 0.0, %v376
        %378 = vdwg.mxu0
        %v379 = vtanh.pop %v341
        %v380 = vtanh.pop %v343
        %v381 = vtanh.pop %v345
        %v382 = vtanh.pop %v347
        %v383 = vtanh.pop %v351
        %v384 = vtanh.pop %v353
        %v385 = vtanh.pop %v355
        %v386 = vtanh.pop %v357
        %v387 = vtanh.pop %v361
        %v388 = vtanh.pop %v363
        %v389 = vtanh.pop %v365
        %v390 = vtanh.pop %v367
        %v391 = vtanh.pop %v371
        %v392 = vtanh.pop %v373
        %v393 = vtanh.pop %v375
        %v394 = vtanh.pop %v377
        %v395 = vld [vmem:[%s2] sm:$0xf]
        %v396 = vld [vmem:[%s2 + $0x4] sm:$0xf]
        %v397 = vld [vmem:[%s2 + $0x8] sm:$0xf]
        %v398 = vld [vmem:[%s2 + $0xc] sm:$0xf]
        %v399 = vld [vmem:[%s2 + $0x10] sm:$0xf]
        %v400 = vld [vmem:[%s2 + $0x14] sm:$0xf]
        %v401 = vld [vmem:[%s2 + $0x18] sm:$0xf]
        %v402 = vld [vmem:[%s2 + $0x1c] sm:$0xf]
        %v403 = vpack.c.bf16 %v381, %v379
        %v404 = vpack.c.bf16 %v382, %v380
        %v405 = vpack.c.bf16 %v385, %v383
        %v406 = vpack.c.bf16 %v386, %v384
        %v407 = vpack.c.bf16 %v389, %v387
        %v408 = vpack.c.bf16 %v390, %v388
        %v409 = vpack.c.bf16 %v393, %v391
        %v410 = vpack.c.bf16 %v394, %v392
        %v411 = vld [vmem:[%s3] sm:$0xff]
        %v412 = vld [vmem:[%s3 + $0x8] sm:$0xff]
        %v413 = vld [vmem:[%s3 + $0x10] sm:$0xff]
        %v414 = vld [vmem:[%s3 + $0x18] sm:$0xff]
        %v415 = vld [vmem:[%s3 + $0x20] sm:$0xff]
        %v416 = vld [vmem:[%s3 + $0x28] sm:$0xff]
        %v417 = vld [vmem:[%s3 + $0x30] sm:$0xff]
        %v418 = vld [vmem:[%s3 + $0x38] sm:$0xff]
        %420 = vset.pattern.permute.xlu0 0
        %421 = vperm.xlu0 %420, %v411
        %v422 = vpop.permute.xlu0 %421
        %425 = vset.pattern.permute.xlu0 0
        %426 = vperm.xlu0 %425, %v412
        %v427 = vpop.permute.xlu0 %426
        %430 = vset.pattern.permute.xlu0 0
        %431 = vperm.xlu0 %430, %v413
        %v432 = vpop.permute.xlu0 %431
        %435 = vset.pattern.permute.xlu0 0
        %436 = vperm.xlu0 %435, %v414
        %v437 = vpop.permute.xlu0 %436
        %440 = vset.pattern.permute.xlu0 0
        %441 = vperm.xlu0 %440, %v415
        %v442 = vpop.permute.xlu0 %441
        %445 = vset.pattern.permute.xlu0 0
        %446 = vperm.xlu0 %445, %v416
        %v447 = vpop.permute.xlu0 %446
        %450 = vset.pattern.permute.xlu0 0
        %451 = vperm.xlu0 %450, %v417
        %v452 = vpop.permute.xlu0 %451
        %455 = vset.pattern.permute.xlu0 0
        %456 = vperm.xlu0 %455, %v418
        %v457 = vpop.permute.xlu0 %456
        %v467 = vunpack.c.l.b16 %v395
        %v468 = vunpack.c.l.b16 %v396
        %v469 = vunpack.c.l.b16 %v397
        %v470 = vunpack.c.l.b16 %v398
        %v471 = vunpack.c.l.b16 %v399
        %v472 = vunpack.c.l.b16 %v400
        %v473 = vunpack.c.l.b16 %v401
        %v474 = vunpack.c.l.b16 %v402
        %v475 = vpack.c.b16 %v468, %v467
        %v476 = vpack.c.b16 %v470, %v469
        %v477 = vpack.c.b16 %v472, %v471
        %v478 = vpack.c.b16 %v474, %v473
        %vm479 = vcmask 523264
        %v481 = vsel %vm479, %v475, 0
        %v484 = vsel %vm479, %v476, 0
        %v487 = vsel %vm479, %v477, 0
        %v490 = vsel %vm479, %v478, 0
        %492 = vmatprep.subr.bf16.mxu0 %v404
        %493 = vmatpush1.bf16.msra.mxu0 %v403
        %494 = vmatprep.subr.bf16.mxu0 %v406
        %495 = vmatpush1.bf16.msra.mxu0 %v405
        %496 = vmatprep.subr.bf16.mxu0 %v408
        %497 = vmatpush1.bf16.msra.mxu0 %v407
        %498 = vmatprep.subr.bf16.mxu0 %v410
        %499 = vmatpush1.bf16.msra.mxu0 %v409
        %500 = vmatprep.subr.bf16.mxu0 0
        %501 = vmatpush1.bf16.msra.mxu0 0
        %502 = vmatprep.subr.bf16.mxu0 0
        %503 = vmatpush1.bf16.msra.mxu0 0
        %504 = vmatprep.subr.bf16.mxu0 0
        %505 = vmatpush1.bf16.msra.mxu0 0
        %506 = vmatprep.subr.bf16.mxu0 0
        %507 = vmatpush1.bf16.msra.mxu0 0
        %508 = vmatprep.subr.bf16.mxu0 0
        %509 = vmatpush1.bf16.msra.mxu0 0
        %510 = vmatprep.subr.bf16.mxu0 0
        %511 = vmatpush1.bf16.msra.mxu0 0
        %512 = vmatprep.subr.bf16.mxu0 0
        %513 = vmatpush1.bf16.msra.mxu0 0
        %514 = vmatprep.subr.bf16.mxu0 0
        %515 = vmatpush1.bf16.msra.mxu0 0
        %516 = vmatprep.subr.bf16.mxu0 0
        %517 = vmatpush1.bf16.msra.mxu0 0
        %518 = vmatprep.subr.bf16.mxu0 0
        %519 = vmatpush1.bf16.msra.mxu0 0
        %520 = vmatprep.subr.bf16.mxu0 0
        %521 = vmatpush1.bf16.msra.mxu0 0
        %522 = vmatprep.subr.bf16.mxu0 0
        %523 = vmatpush1.bf16.msra.mxu0 0
        %524 = vmatprep.mubr.bf16.mxu0 0
        %525 = vmatmul.mubr.bf16.gmra.mrb[0].mxu0 %v481
        %v526 = vpop.f32.mrb[0].mxu0
        %v527 = vadd.f32 %v422, %v526
        %v528 = vpop.f32.mrb[0].mxu0
        %v529 = vadd.f32 %v422, %v528
        %v530 = vpop.f32.mrb[0].mxu0
        %v531 = vadd.f32 %v427, %v530
        %v532 = vpop.f32.mrb[0].mxu0
        %v533 = vadd.f32 %v427, %v532
        %534 = vmatprep.mubr.bf16.mxu0 0
        %535 = vmatmul.mubr.bf16.gmra.mrb[0].mxu0 %v484
        %v536 = vpop.f32.mrb[0].mxu0
        %v537 = vadd.f32 %v432, %v536
        %v538 = vpop.f32.mrb[0].mxu0
        %v539 = vadd.f32 %v432, %v538
        %v540 = vpop.f32.mrb[0].mxu0
        %v541 = vadd.f32 %v437, %v540
        %v542 = vpop.f32.mrb[0].mxu0
        %v543 = vadd.f32 %v437, %v542
        %544 = vmatprep.mubr.bf16.mxu0 0
        %545 = vmatmul.mubr.bf16.gmra.mrb[0].mxu0 %v487
        %v546 = vpop.f32.mrb[0].mxu0
        %v547 = vadd.f32 %v442, %v546
        %v548 = vpop.f32.mrb[0].mxu0
        %v549 = vadd.f32 %v442, %v548
        %v550 = vpop.f32.mrb[0].mxu0
        %v551 = vadd.f32 %v447, %v550
        %v552 = vpop.f32.mrb[0].mxu0
        %v553 = vadd.f32 %v447, %v552
        %554 = vmatprep.mubr.bf16.mxu0 0
        %555 = vmatmul.mubr.bf16.gmra.mrb[0].mxu0 %v490
        %v556 = vpop.f32.mrb[0].mxu0
        %v557 = vadd.f32 %v452, %v556
        %v558 = vpop.f32.mrb[0].mxu0
        %v559 = vadd.f32 %v452, %v558
        %v560 = vpop.f32.mrb[0].mxu0
        %v561 = vadd.f32 %v457, %v560
        %v562 = vpop.f32.mrb[0].mxu0
        %v563 = vadd.f32 %v457, %v562
        %564 = vdwg.mxu0
        %v565 = vtanh.pop %v527
        %v566 = vtanh.pop %v529
        %v567 = vtanh.pop %v531
        %v568 = vtanh.pop %v533
        %v569 = vtanh.pop %v537
        %v570 = vtanh.pop %v539
        %v571 = vtanh.pop %v541
        %v572 = vtanh.pop %v543
        %v573 = vtanh.pop %v547
        %v574 = vtanh.pop %v549
        %v575 = vtanh.pop %v551
        %v576 = vtanh.pop %v553
        %v577 = vtanh.pop %v557
        %v578 = vtanh.pop %v559
        %v579 = vtanh.pop %v561
        %v580 = vtanh.pop %v563
        %v581 = vld [vmem:[%s4] sm:$0x1]
        %v582 = vpack.c.bf16 %v567, %v565
        %v583 = vpack.c.bf16 %v568, %v566
        %v584 = vpack.c.bf16 %v571, %v569
        %v585 = vpack.c.bf16 %v572, %v570
        %v586 = vpack.c.bf16 %v575, %v573
        %v587 = vpack.c.bf16 %v576, %v574
        %v588 = vpack.c.bf16 %v579, %v577
        %v589 = vpack.c.bf16 %v580, %v578
        %v590 = vld [vmem:[%s5] sm:$0x3]
        %592 = vset.pattern.permute.xlu0 0
        %593 = vperm.xlu0 %592, %v590
        %v594 = vpop.permute.xlu0 %593
        %v597 = vsel %vm479, %v581, 0
        %599 = vmatprep.subr.bf16.mxu0 %v583
        %600 = vmatpush1.bf16.msra.mxu0 %v582
        %601 = vmatprep.subr.bf16.mxu0 %v585
        %602 = vmatpush1.bf16.msra.mxu0 %v584
        %603 = vmatprep.subr.bf16.mxu0 %v587
        %604 = vmatpush1.bf16.msra.mxu0 %v586
        %605 = vmatprep.subr.bf16.mxu0 %v589
        %606 = vmatpush1.bf16.msra.mxu0 %v588
        %607 = vmatprep.subr.bf16.mxu0 0
        %608 = vmatpush1.bf16.msra.mxu0 0
        %609 = vmatprep.subr.bf16.mxu0 0
        %610 = vmatpush1.bf16.msra.mxu0 0
        %611 = vmatprep.subr.bf16.mxu0 0
        %612 = vmatpush1.bf16.msra.mxu0 0
        %613 = vmatprep.subr.bf16.mxu0 0
        %614 = vmatpush1.bf16.msra.mxu0 0
        %615 = vmatprep.subr.bf16.mxu0 0
        %616 = vmatpush1.bf16.msra.mxu0 0
        %617 = vmatprep.subr.bf16.mxu0 0
        %618 = vmatpush1.bf16.msra.mxu0 0
        %619 = vmatprep.subr.bf16.mxu0 0
        %620 = vmatpush1.bf16.msra.mxu0 0
        %621 = vmatprep.subr.bf16.mxu0 0
        %622 = vmatpush1.bf16.msra.mxu0 0
        %623 = vmatprep.subr.bf16.mxu0 0
        %624 = vmatpush1.bf16.msra.mxu0 0
        %625 = vmatprep.subr.bf16.mxu0 0
        %626 = vmatpush1.bf16.msra.mxu0 0
        %627 = vmatprep.subr.bf16.mxu0 0
        %628 = vmatpush1.bf16.msra.mxu0 0
        %629 = vmatprep.subr.bf16.mxu0 0
        %630 = vmatpush1.bf16.msra.mxu0 0
        %631 = vmatprep.mubr.bf16.mxu0 0
        %632 = vmatmul.mubr.bf16.gmra.mrb[0].mxu0 %v597
        %v633 = vpop.f32.mrb[0].mxu0
        %v634 = vadd.f32 %v594, %v633
        %v635 = vpop.f32.mrb[0].mxu0
        %v636 = vadd.f32 %v594, %v635
        %v637 = vpop.f32.mrb[0].mxu0
        %v638 = vpop.f32.mrb[0].mxu0
        %639 = vdwg.mxu0
        %v642 = vcombine.low %v634, %v636
        %v644 = vunpack.c.l.s4 1983009808
        %v645 = vunpack.c.0.s8 %v644
        %v646 = vlaneseq
        %v647 = vshrl.u32 %v646, 7
        %v648 = vsub.s32 %v645, %v647
        %v649 = vrot.slane %v642, %v648
        %651 = vst [vmem:[%s245] sm:$0xf] %v649
        %s652 = sand.u32 %s159, 1
        %s653 = scalar_lea.sflag [#allocation3], %s652
        %s654 = sand.u32 %s159, 1
        %s655 = smul.addr %s654, 4
        %s656 = scalar_lea.vmem [#allocation2], %s655
        // Predicated region
        $region45: #{swenet_forward_slab.1} parent=43 // pred_check
          %p657 = pneg %p169
        $region46: #{swenet_forward_slab.1} parent=43 // pred_check_branch
          %659 = sbr.rel (%p657) target = $region48
        $region47: #{swenet_forward_slab.1} parent=43 // pred_region
          %s660 = smul.u32 2, %s20
          %s662 = ssub.s32 64, 64
          %663 = vsyncadd %s653, %s662
          %s664 = smul.addr %s660, 32
          %s665 = scalar_lea.hbm %s6, %s664
          %s667 = sshll.u32 %s656, 4
          %s668 = int_to_ptr.vmem [resolvable:$true] %s667
          %670 = dma.vmem_to_hbm [thread:$0]  %s668, 64, %s665, %s653
        $region48: #{swenet_forward_slab.1} parent=43 // pred_fallthru
          _
      $region44: #{swenet_forward_slab.1} parent=5 // pred_fallthru
        _
      %p671 = scmp.le.s32.totalorder 2, %s15
      // Predicated region
      $region49: #{swenet_forward_slab.1} parent=5 // pred_check
        %p672 = pneg %p671
      $region50: #{swenet_forward_slab.1} parent=5 // pred_check_branch
        %674 = sbr.rel (%p672) target = $region52
      $region51: #{swenet_forward_slab.1} parent=5 // pred_region
        %s675 = ssub.s32 %s15, 2
        // Predicated region
        $region53: #{swenet_forward_slab.1} parent=51 // pred_check
          %p676 = pneg %p175
        $region54: #{swenet_forward_slab.1} parent=51 // pred_check_branch
          %678 = sbr.rel (%p676) target = $region56
        $region55: #{swenet_forward_slab.1} parent=51 // pred_region
          %s679 = sand.u32 %s160, 1
          %s680 = scalar_lea.sflag [#allocation3], %s679
          %s681 = sand.u32 %s160, 1
          %s682 = smul.addr %s681, 4
          %s683 = scalar_lea.vmem [#allocation2], %s682
          %684 = dma.done %s680, 64
        $region56: #{swenet_forward_slab.1} parent=51 // pred_fallthru
          _
      $region52: #{swenet_forward_slab.1} parent=5 // pred_fallthru
        _
    $region6: #{swenet_forward_slab.1} parent=1 // loop_footer
      %s19 = sadd.s32 1, %s15
    $region7: #{swenet_forward_slab.1} parent=1 // loop_footer_branch
      %14 = sbr.rel target = $region3
    $region8: #{swenet_forward_slab.1} parent=1 // loop_exit
      _
    %685 = vsyncpa [#allocation3], 1
    %s686 = scalar_lea.sflag [#allocation3], 1
    %687 = vsyncpa %s686, 1

</llo_original>
